<compile_context>
chip_gen: v7x
topology: tpu7x:2x2x1
jax: 0.10.0
libtpu: 0.0.40
codegen_flags: <defaults>
</compile_context>

<pallas_src>
import jax
import jax.numpy as jnp
from jax.experimental import pallas as pl
from jax.experimental.pallas import tpu as pltpu

IN_FEATS = 512
HID1 = 256
HID2 = 180
HID2_PAD = 256     # 180 padded up so layer-2/3 matmul dims are 128-multiples
LANE = 128


def _round_up(x, m):
    return ((x + m - 1) // m) * m


def _mlc_kernel(x_ref, w1_ref, b1_ref, w2_ref, b2_ref, w3_ref, b3_ref, o_ref):
    # Layer 1: Linear(512 -> 256) + ReLU  (bf16 operands, f32 MXU accumulation)
    h1 = jnp.dot(x_ref[...], w1_ref[...], preferred_element_type=jnp.float32)
    h1 = jnp.maximum(h1 + b1_ref[...], 0.0)
    # Dropout(0.2) -> identity at inference

    # Layer 2: Linear(256 -> 256[padded from 180]) + ReLU
    h2 = jnp.dot(h1.astype(jnp.bfloat16), w2_ref[...],
                 preferred_element_type=jnp.float32)
    h2 = jnp.maximum(h2 + b2_ref[...], 0.0)
    # Dropout(0.2) -> identity at inference

    # Layer 3: Linear(256[padded] -> n_classes padded to 128 lanes)
    out = jnp.dot(h2.astype(jnp.bfloat16), w3_ref[...],
                  preferred_element_type=jnp.float32)
    o_ref[...] = (out + b3_ref[...]).astype(o_ref.dtype)


@jax.jit
def simple_mlc_forward(x, params):
    """x: [B, 512] float32. params: w1,b1,w2,b2,w3,b3 (weights [in,out], biases [1,out])."""
    B = x.shape[0]
    n_classes = params["w3"].shape[1]
    nc_pad = _round_up(n_classes, LANE)

    # Batch tile: big enough to pipeline well, never larger than (padded) B.
    TB = min(512, _round_up(B, 8))
    B_pad = _round_up(B, TB)
    grid_b = B_pad // TB

    # Pad + cast operands (zero padding is exact; see header comment).
    x_p = jnp.pad(x, ((0, B_pad - B), (0, 0))).astype(jnp.bfloat16)
    w1 = params["w1"].astype(jnp.bfloat16)
    b1 = params["b1"]
    w2 = jnp.pad(params["w2"], ((0, 0), (0, HID2_PAD - HID2))).astype(jnp.bfloat16)
    b2 = jnp.pad(params["b2"], ((0, 0), (0, HID2_PAD - HID2)))
    w3 = jnp.pad(params["w3"],
                 ((0, HID2_PAD - HID2), (0, nc_pad - n_classes))).astype(jnp.bfloat16)
    b3 = jnp.pad(params["b3"], ((0, 0), (0, nc_pad - n_classes)))

    bytes_accessed = (
        x_p.size * 2 + w1.size * 2 + w2.size * 2 + w3.size * 2
        + b1.size * 4 + b2.size * 4 + b3.size * 4
        + B_pad * nc_pad * 4
    )
    cost = pl.CostEstimate(
        flops=2 * B_pad * (IN_FEATS * HID1 + HID1 * HID2_PAD + HID2_PAD * nc_pad),
        transcendentals=0,
        bytes_accessed=bytes_accessed,
    )

    resident = lambda shape: pl.BlockSpec(shape, lambda i: (0, 0))

    out = pl.pallas_call(
        _mlc_kernel,
        out_shape=jax.ShapeDtypeStruct((B_pad, nc_pad), jnp.float32),
        grid=(grid_b,),
        in_specs=[
            pl.BlockSpec((TB, IN_FEATS), lambda i: (i, 0)),   # x: batch-tiled
            resident((IN_FEATS, HID1)),                       # w1 resident in VMEM
            resident((1, HID1)),                              # b1
            resident((HID1, HID2_PAD)),                       # w2
            resident((1, HID2_PAD)),                          # b2
            resident((HID2_PAD, nc_pad)),                     # w3
            resident((1, nc_pad)),                            # b3
        ],
        out_specs=pl.BlockSpec((TB, nc_pad), lambda i: (i, 0)),
        compiler_params=pltpu.CompilerParams(
            dimension_semantics=("parallel",),   # megacore-shard batch tiles on v7x
            vmem_limit_bytes=32 << 20,
        ),
        cost_estimate=cost,
    )(x_p, w1, b1, w2, b2, w3, b3)

    return out[:B, :n_classes]


def init_params(key, n_classes):
    """Deterministic init mimicking PyTorch's default Linear init:
    U(-1/sqrt(fan_in), 1/sqrt(fan_in)) for both weight and bias."""
    def linear(key, fan_in, fan_out):
        kw, kb = jax.random.split(key)
        bound = 1.0 / jnp.sqrt(float(fan_in))
        w = jax.random.uniform(kw, (fan_in, fan_out), jnp.float32, -bound, bound)
        b = jax.random.uniform(kb, (1, fan_out), jnp.float32, -bound, bound)
        return w, b

    k1, k2, k3 = jax.random.split(key, 3)
    w1, b1 = linear(k1, IN_FEATS, HID1)
    w2, b2 = linear(k2, HID1, HID2)
    w3, b3 = linear(k3, HID2, n_classes)
    return {"w1": w1, "b1": b1, "w2": w2, "b2": b2, "w3": w3, "b3": b3}


def _reference(x, p):
    """Pure-JAX reference with the same bf16 operand rounding / f32 accumulation."""
    bf = lambda a: a.astype(jnp.bfloat16)
    h1 = jnp.maximum(
        jnp.dot(bf(x), bf(p["w1"]), preferred_element_type=jnp.float32) + p["b1"], 0.0)
    h2 = jnp.maximum(
        jnp.dot(bf(h1), bf(p["w2"]), preferred_element_type=jnp.float32) + p["b2"], 0.0)
    return jnp.dot(bf(h2), bf(p["w3"]), preferred_element_type=jnp.float32) + p["b3"]


if __name__ == "__main__":
    key = jax.random.PRNGKey(0)
    kx, kp = jax.random.split(key)

    n_classes = 10
    batch = 2
    x = jax.random.normal(kx, (batch, IN_FEATS), jnp.float32)
    params = init_params(kp, n_classes)

    out = jax.block_until_ready(simple_mlc_forward(x, params))
    ref = _reference(x, params)

    assert out.shape == (batch, n_classes), out.shape
    assert jnp.allclose(out, ref, atol=1e-4, rtol=1e-4), "mismatch vs reference"

    print("KERNEL_OK")
</pallas_src>

<mosaic_0001>
module attributes {stable_mosaic.version = 11 : i64} {
  func.func @_mlc_kernel(%arg0: i32, %arg1: memref<8x512xbf16, #tpu.memory_space<vmem>>, %arg2: memref<512x256xbf16, #tpu.memory_space<vmem>>, %arg3: memref<1x256xf32, #tpu.memory_space<vmem>>, %arg4: memref<256x256xbf16, #tpu.memory_space<vmem>>, %arg5: memref<1x256xf32, #tpu.memory_space<vmem>>, %arg6: memref<256x128xbf16, #tpu.memory_space<vmem>>, %arg7: memref<1x128xf32, #tpu.memory_space<vmem>>, %arg8: memref<8x128xf32, #tpu.memory_space<vmem>>) attributes {dimension_semantics = [#tpu.dimension_semantics<parallel>], iteration_bounds = array<i64: 1>, scalar_prefetch = 0 : i64, scratch_operands = 0 : i64, tpu.core_type = #tpu.core_type<tc>, window_params = [{transform_indices = @transform_0, window_bounds = array<i64: 8, 512>}, {pipeline_mode = #tpu.pipeline_mode<synchronous>, transform_indices = @transform_1, window_bounds = array<i64: 512, 256>}, {pipeline_mode = #tpu.pipeline_mode<synchronous>, transform_indices = @transform_2, window_bounds = array<i64: 1, 256>}, {pipeline_mode = #tpu.pipeline_mode<synchronous>, transform_indices = @transform_3, window_bounds = array<i64: 256, 256>}, {pipeline_mode = #tpu.pipeline_mode<synchronous>, transform_indices = @transform_4, window_bounds = array<i64: 1, 256>}, {pipeline_mode = #tpu.pipeline_mode<synchronous>, transform_indices = @transform_5, window_bounds = array<i64: 256, 128>}, {pipeline_mode = #tpu.pipeline_mode<synchronous>, transform_indices = @transform_6, window_bounds = array<i64: 1, 128>}, {transform_indices = @transform_7, window_bounds = array<i64: 8, 128>}]} {
    %c0 = arith.constant 0 : index
    %c0_0 = arith.constant 0 : index
    %0 = vector.load %arg1[%c0, %c0_0] : memref<8x512xbf16, #tpu.memory_space<vmem>>, vector<8x512xbf16>
    %c0_1 = arith.constant 0 : index
    %c0_2 = arith.constant 0 : index
    %1 = vector.load %arg2[%c0_1, %c0_2] : memref<512x256xbf16, #tpu.memory_space<vmem>>, vector<512x256xbf16>
    %cst = arith.constant dense<0.000000e+00> : vector<8x256xf32>
    %2 = tpu.matmul %0, %1, %cst {dimension_numbers = #tpu.dot_dimension_numbers<[1], [0], [0], [1], [0, 0, 1, 1], [], []>} : vector<8x512xbf16>, vector<512x256xbf16>, vector<8x256xf32> -> vector<8x256xf32>
    %c0_3 = arith.constant 0 : index
    %c0_4 = arith.constant 0 : index
    %3 = vector.load %arg3[%c0_3, %c0_4] : memref<1x256xf32, #tpu.memory_space<vmem>>, vector<1x256xf32>
    %4 = vector.broadcast %3 : vector<1x256xf32> to vector<8x256xf32>
    %5 = arith.addf %2, %4 : vector<8x256xf32>
    %cst_5 = arith.constant 0.000000e+00 : f32
    %6 = vector.broadcast %cst_5 : f32 to vector<8x256xf32>
    %7 = arith.maximumf %5, %6 : vector<8x256xf32>
    %8 = arith.truncf %7 : vector<8x256xf32> to vector<8x256xbf16>
    %c0_6 = arith.constant 0 : index
    %c0_7 = arith.constant 0 : index
    %9 = vector.load %arg4[%c0_6, %c0_7] : memref<256x256xbf16, #tpu.memory_space<vmem>>, vector<256x256xbf16>
    %cst_8 = arith.constant dense<0.000000e+00> : vector<8x256xf32>
    %10 = tpu.matmul %8, %9, %cst_8 {dimension_numbers = #tpu.dot_dimension_numbers<[1], [0], [0], [1], [0, 0, 1, 1], [], []>} : vector<8x256xbf16>, vector<256x256xbf16>, vector<8x256xf32> -> vector<8x256xf32>
    %c0_9 = arith.constant 0 : index
    %c0_10 = arith.constant 0 : index
    %11 = vector.load %arg5[%c0_9, %c0_10] : memref<1x256xf32, #tpu.memory_space<vmem>>, vector<1x256xf32>
    %12 = vector.broadcast %11 : vector<1x256xf32> to vector<8x256xf32>
    %13 = arith.addf %10, %12 : vector<8x256xf32>
    %cst_11 = arith.constant 0.000000e+00 : f32
    %14 = vector.broadcast %cst_11 : f32 to vector<8x256xf32>
    %15 = arith.maximumf %13, %14 : vector<8x256xf32>
    %16 = arith.truncf %15 : vector<8x256xf32> to vector<8x256xbf16>
    %c0_12 = arith.constant 0 : index
    %c0_13 = arith.constant 0 : index
    %17 = vector.load %arg6[%c0_12, %c0_13] : memref<256x128xbf16, #tpu.memory_space<vmem>>, vector<256x128xbf16>
    %cst_14 = arith.constant dense<0.000000e+00> : vector<8x128xf32>
    %18 = tpu.matmul %16, %17, %cst_14 {dimension_numbers = #tpu.dot_dimension_numbers<[1], [0], [0], [1], [0, 0, 1, 1], [], []>} : vector<8x256xbf16>, vector<256x128xbf16>, vector<8x128xf32> -> vector<8x128xf32>
    %c0_15 = arith.constant 0 : index
    %c0_16 = arith.constant 0 : index
    %19 = vector.load %arg7[%c0_15, %c0_16] : memref<1x128xf32, #tpu.memory_space<vmem>>, vector<1x128xf32>
    %20 = vector.broadcast %19 : vector<1x128xf32> to vector<8x128xf32>
    %21 = arith.addf %18, %20 : vector<8x128xf32>
    %c0_17 = arith.constant 0 : index
    %c0_18 = arith.constant 0 : index
    %22 = vector.load %arg8[%c0_17, %c0_18] : memref<8x128xf32, #tpu.memory_space<vmem>>, vector<8x128xf32>
    tpu.vector_store %arg8[%c0_17, %c0_18], %21 {strides = array<i32>} : memref<8x128xf32, #tpu.memory_space<vmem>>, vector<8x128xf32>,
    return
  }
  func.func @transform_0(%arg0: i32) -> (i32, i32) {
    %c0_i32 = arith.constant 0 : i32
    %c0_i32_0 = arith.constant 0 : i32
    return %arg0, %c0_i32 : i32, i32
  }
  func.func @transform_1(%arg0: i32) -> (i32, i32) {
    %c0_i32 = arith.constant 0 : i32
    %c0_i32_0 = arith.constant 0 : i32
    %c0_i32_1 = arith.constant 0 : i32
    return %c0_i32, %c0_i32_0 : i32, i32
  }
  func.func @transform_2(%arg0: i32) -> (i32, i32) {
    %c0_i32 = arith.constant 0 : i32
    %c0_i32_0 = arith.constant 0 : i32
    %c0_i32_1 = arith.constant 0 : i32
    return %c0_i32, %c0_i32_0 : i32, i32
  }
  func.func @transform_3(%arg0: i32) -> (i32, i32) {
    %c0_i32 = arith.constant 0 : i32
    %c0_i32_0 = arith.constant 0 : i32
    %c0_i32_1 = arith.constant 0 : i32
    return %c0_i32, %c0_i32_0 : i32, i32
  }
  func.func @transform_4(%arg0: i32) -> (i32, i32) {
    %c0_i32 = arith.constant 0 : i32
    %c0_i32_0 = arith.constant 0 : i32
    %c0_i32_1 = arith.constant 0 : i32
    return %c0_i32, %c0_i32_0 : i32, i32
  }
  func.func @transform_5(%arg0: i32) -> (i32, i32) {
    %c0_i32 = arith.constant 0 : i32
    %c0_i32_0 = arith.constant 0 : i32
    %c0_i32_1 = arith.constant 0 : i32
    return %c0_i32, %c0_i32_0 : i32, i32
  }
  func.func @transform_6(%arg0: i32) -> (i32, i32) {
    %c0_i32 = arith.constant 0 : i32
    %c0_i32_0 = arith.constant 0 : i32
    %c0_i32_1 = arith.constant 0 : i32
    return %c0_i32, %c0_i32_0 : i32, i32
  }
  func.func @transform_7(%arg0: i32) -> (i32, i32) {
    %c0_i32 = arith.constant 0 : i32
    %c0_i32_0 = arith.constant 0 : i32
    return %arg0, %c0_i32 : i32, i32
  }
}

</mosaic_0001>

<llo_original>
// kernel: simple_mlc_forward.1
$region0: #{simple_mlc_forward.1}
  #allocation0 [shape = 'u32[]', space=smem, size = 0x4, offset = 0x4, fixed_abs, tag = 'smem constant byte address 0x4 - core index']
  #allocation1 [shape = 'u32[144,128]{1,0:T(1,128)}', space=vmem, size = 0x12000, scoped, tag = 'internal scratch']
  %s0 = inlined_call_operand.vmem [shape: bf16[8,512], index: 0, kind: input, shape index: {}]
  %s1 = inlined_call_operand.vmem [shape: bf16[512,256], index: 1, kind: input, shape index: {}]
  %s2 = inlined_call_operand.vmem [shape: f32[1,256], index: 2, kind: input, shape index: {}]
  %s3 = inlined_call_operand.vmem [shape: bf16[256,256], index: 3, kind: input, shape index: {}]
  %s4 = inlined_call_operand.vmem [shape: f32[1,256], index: 4, kind: input, shape index: {}]
  %s5 = inlined_call_operand.vmem [shape: bf16[256,128], index: 5, kind: input, shape index: {}]
  %s6 = inlined_call_operand.vmem [shape: f32[1,128], index: 6, kind: input, shape index: {}]
  %s7 = inlined_call_operand.vmem [shape: f32[8,128], index: 7, kind: output, shape index: {}]
  %s8 = sld [smem:[#allocation0]]
  $region38: #{simple_mlc_forward.1} parent=0
    _
  %s10 = ssub.s32 1, %s8
  %s11 = scalar_select 0, %s10, %s8
  // Predicated region
  $region2: #{simple_mlc_forward.1} parent=0 // pred_check
    _
  $region3: #{simple_mlc_forward.1} parent=0 // pred_check_branch
    %13 = sbr.rel (0) target = $region5
  $region4: #{simple_mlc_forward.1} parent=0 // pred_region
    _
  $region5: #{simple_mlc_forward.1} parent=0 // pred_fallthru
    _
  // Predicated region
  $region6: #{simple_mlc_forward.1} parent=0 // pred_check
    _
  $region7: #{simple_mlc_forward.1} parent=0 // pred_check_branch
    %15 = sbr.rel (0) target = $region9
  $region8: #{simple_mlc_forward.1} parent=0 // pred_region
    _
  $region9: #{simple_mlc_forward.1} parent=0 // pred_fallthru
    _
  // Predicated region
  $region10: #{simple_mlc_forward.1} parent=0 // pred_check
    _
  $region11: #{simple_mlc_forward.1} parent=0 // pred_check_branch
    %17 = sbr.rel (0) target = $region13
  $region12: #{simple_mlc_forward.1} parent=0 // pred_region
    _
  $region13: #{simple_mlc_forward.1} parent=0 // pred_fallthru
    _
  // Predicated region
  $region14: #{simple_mlc_forward.1} parent=0 // pred_check
    _
  $region15: #{simple_mlc_forward.1} parent=0 // pred_check_branch
    %19 = sbr.rel (0) target = $region17
  $region16: #{simple_mlc_forward.1} parent=0 // pred_region
    _
  $region17: #{simple_mlc_forward.1} parent=0 // pred_fallthru
    _
  // Predicated region
  $region18: #{simple_mlc_forward.1} parent=0 // pred_check
    _
  $region19: #{simple_mlc_forward.1} parent=0 // pred_check_branch
    %21 = sbr.rel (0) target = $region21
  $region20: #{simple_mlc_forward.1} parent=0 // pred_region
    _
  $region21: #{simple_mlc_forward.1} parent=0 // pred_fallthru
    _
  // Predicated region
  $region22: #{simple_mlc_forward.1} parent=0 // pred_check
    _
  $region23: #{simple_mlc_forward.1} parent=0 // pred_check_branch
    %23 = sbr.rel (0) target = $region25
  $region24: #{simple_mlc_forward.1} parent=0 // pred_region
    _
  $region25: #{simple_mlc_forward.1} parent=0 // pred_fallthru
    _
  // Predicated region
  $region26: #{simple_mlc_forward.1} parent=0 // pred_check
    _
  $region27: #{simple_mlc_forward.1} parent=0 // pred_check_branch
    %25 = sbr.rel (0) target = $region29
  $region28: #{simple_mlc_forward.1} parent=0 // pred_region
    _
  $region29: #{simple_mlc_forward.1} parent=0 // pred_fallthru
    _
  %v27 = vld [vmem:[%s0] sm:$0xff]
  %v28 = vld [vmem:[%s0 + $0x8] sm:$0xff]
  %v29 = vld [vmem:[%s1] sm:$0xff]
  %v30 = vld [vmem:[%s1 + $0x8] sm:$0xff]
  %v31 = vld [vmem:[%s1 + $0x10] sm:$0xff]
  %v32 = vld [vmem:[%s1 + $0x18] sm:$0xff]
  %v33 = vld [vmem:[%s1 + $0x20] sm:$0xff]
  %v34 = vld [vmem:[%s1 + $0x28] sm:$0xff]
  %v35 = vld [vmem:[%s1 + $0x30] sm:$0xff]
  %v36 = vld [vmem:[%s1 + $0x38] sm:$0xff]
  %v37 = vld [vmem:[%s1 + $0x40] sm:$0xff]
  %v38 = vld [vmem:[%s1 + $0x48] sm:$0xff]
  %v39 = vld [vmem:[%s1 + $0x50] sm:$0xff]
  %v40 = vld [vmem:[%s1 + $0x58] sm:$0xff]
  %v41 = vld [vmem:[%s1 + $0x60] sm:$0xff]
  %v42 = vld [vmem:[%s1 + $0x68] sm:$0xff]
  %v43 = vld [vmem:[%s1 + $0x70] sm:$0xff]
  %v44 = vld [vmem:[%s1 + $0x78] sm:$0xff]
  %v45 = vld [vmem:[%s1 + $0x80] sm:$0xff]
  %v46 = vld [vmem:[%s1 + $0x88] sm:$0xff]
  %v47 = vld [vmem:[%s1 + $0x90] sm:$0xff]
  %v48 = vld [vmem:[%s1 + $0x98] sm:$0xff]
  %v49 = vld [vmem:[%s1 + $0xa0] sm:$0xff]
  %v50 = vld [vmem:[%s1 + $0xa8] sm:$0xff]
  %v51 = vld [vmem:[%s1 + $0xb0] sm:$0xff]
  %v52 = vld [vmem:[%s1 + $0xb8] sm:$0xff]
  %v53 = vld [vmem:[%s1 + $0xc0] sm:$0xff]
  %v54 = vld [vmem:[%s1 + $0xc8] sm:$0xff]
  %v55 = vld [vmem:[%s1 + $0xd0] sm:$0xff]
  %v56 = vld [vmem:[%s1 + $0xd8] sm:$0xff]
  %v57 = vld [vmem:[%s1 + $0xe0] sm:$0xff]
  %v58 = vld [vmem:[%s1 + $0xe8] sm:$0xff]
  %v59 = vld [vmem:[%s1 + $0xf0] sm:$0xff]
  %v60 = vld [vmem:[%s1 + $0xf8] sm:$0xff]
  %v61 = vld [vmem:[%s1 + $0x100] sm:$0xff]
  %v62 = vld [vmem:[%s1 + $0x108] sm:$0xff]
  %v63 = vld [vmem:[%s1 + $0x110] sm:$0xff]
  %v64 = vld [vmem:[%s1 + $0x118] sm:$0xff]
  %v65 = vld [vmem:[%s1 + $0x120] sm:$0xff]
  %v66 = vld [vmem:[%s1 + $0x128] sm:$0xff]
  %v67 = vld [vmem:[%s1 + $0x130] sm:$0xff]
  %v68 = vld [vmem:[%s1 + $0x138] sm:$0xff]
  %v69 = vld [vmem:[%s1 + $0x140] sm:$0xff]
  %v70 = vld [vmem:[%s1 + $0x148] sm:$0xff]
  %v71 = vld [vmem:[%s1 + $0x150] sm:$0xff]
  %v72 = vld [vmem:[%s1 + $0x158] sm:$0xff]
  %v73 = vld [vmem:[%s1 + $0x160] sm:$0xff]
  %v74 = vld [vmem:[%s1 + $0x168] sm:$0xff]
  %v75 = vld [vmem:[%s1 + $0x170] sm:$0xff]
  %v76 = vld [vmem:[%s1 + $0x178] sm:$0xff]
  %v77 = vld [vmem:[%s1 + $0x180] sm:$0xff]
  %v78 = vld [vmem:[%s1 + $0x188] sm:$0xff]
  %v79 = vld [vmem:[%s1 + $0x190] sm:$0xff]
  %v80 = vld [vmem:[%s1 + $0x198] sm:$0xff]
  %v81 = vld [vmem:[%s1 + $0x1a0] sm:$0xff]
  %v82 = vld [vmem:[%s1 + $0x1a8] sm:$0xff]
  %v83 = vld [vmem:[%s1 + $0x1b0] sm:$0xff]
  %v84 = vld [vmem:[%s1 + $0x1b8] sm:$0xff]
  %v85 = vld [vmem:[%s1 + $0x1c0] sm:$0xff]
  %v86 = vld [vmem:[%s1 + $0x1c8] sm:$0xff]
  %v87 = vld [vmem:[%s1 + $0x1d0] sm:$0xff]
  %v88 = vld [vmem:[%s1 + $0x1d8] sm:$0xff]
  %v89 = vld [vmem:[%s1 + $0x1e0] sm:$0xff]
  %v90 = vld [vmem:[%s1 + $0x1e8] sm:$0xff]
  %v91 = vld [vmem:[%s1 + $0x1f0] sm:$0xff]
  %v92 = vld [vmem:[%s1 + $0x1f8] sm:$0xff]
  %v93 = vld [vmem:[%s2] sm:$0x3]
  %v95 = vlaneseq
  %v96 = vshrl.u32 %v95, 7
  %v97 = vsub.s32 0, %v96
  %v98 = vrot.slane %v93, %v97
  %v99 = vlaneseq
  %v100 = vshrl.u32 %v99, 7
  %v101 = vsub.s32 1, %v100
  %v102 = vrot.slane %v93, %v101
  %v107 = vunpack.c.l.b16 %v27
  %v108 = vunpack.c.h.b16 %v27
  %v109 = vunpack.c.l.b16 %v28
  %v110 = vunpack.c.h.b16 %v28
  %v111 = vpack.c.b16 %v107, %v107
  %v112 = vpack.c.b16 %v108, %v108
  %v113 = vpack.c.b16 %v109, %v109
  %v114 = vpack.c.b16 %v110, %v110
  %v183 = vunpack.c.l.b16 %v29
  %v184 = vunpack.c.h.b16 %v29
  %v185 = vunpack.c.l.b16 %v30
  %v186 = vunpack.c.h.b16 %v30
  %v187 = vunpack.c.l.b16 %v31
  %v188 = vunpack.c.h.b16 %v31
  %v189 = vunpack.c.l.b16 %v32
  %v190 = vunpack.c.h.b16 %v32
  %v191 = vunpack.c.l.b16 %v33
  %v192 = vunpack.c.h.b16 %v33
  %v193 = vunpack.c.l.b16 %v34
  %v194 = vunpack.c.h.b16 %v34
  %v195 = vunpack.c.l.b16 %v35
  %v196 = vunpack.c.h.b16 %v35
  %v197 = vunpack.c.l.b16 %v36
  %v198 = vunpack.c.h.b16 %v36
  %v199 = vunpack.c.l.b16 %v37
  %v200 = vunpack.c.h.b16 %v37
  %v201 = vunpack.c.l.b16 %v38
  %v202 = vunpack.c.h.b16 %v38
  %v203 = vunpack.c.l.b16 %v39
  %v204 = vunpack.c.h.b16 %v39
  %v205 = vunpack.c.l.b16 %v40
  %v206 = vunpack.c.h.b16 %v40
  %v207 = vunpack.c.l.b16 %v41
  %v208 = vunpack.c.h.b16 %v41
  %v209 = vunpack.c.l.b16 %v42
  %v210 = vunpack.c.h.b16 %v42
  %v211 = vunpack.c.l.b16 %v43
  %v212 = vunpack.c.h.b16 %v43
  %v213 = vunpack.c.l.b16 %v44
  %v214 = vunpack.c.h.b16 %v44
  %v215 = vunpack.c.l.b16 %v45
  %v216 = vunpack.c.h.b16 %v45
  %v217 = vunpack.c.l.b16 %v46
  %v218 = vunpack.c.h.b16 %v46
  %v219 = vunpack.c.l.b16 %v47
  %v220 = vunpack.c.h.b16 %v47
  %v221 = vunpack.c.l.b16 %v48
  %v222 = vunpack.c.h.b16 %v48
  %v223 = vunpack.c.l.b16 %v49
  %v224 = vunpack.c.h.b16 %v49
  %v225 = vunpack.c.l.b16 %v50
  %v226 = vunpack.c.h.b16 %v50
  %v227 = vunpack.c.l.b16 %v51
  %v228 = vunpack.c.h.b16 %v51
  %v229 = vunpack.c.l.b16 %v52
  %v230 = vunpack.c.h.b16 %v52
  %v231 = vunpack.c.l.b16 %v53
  %v232 = vunpack.c.h.b16 %v53
  %v233 = vunpack.c.l.b16 %v54
  %v234 = vunpack.c.h.b16 %v54
  %v235 = vunpack.c.l.b16 %v55
  %v236 = vunpack.c.h.b16 %v55
  %v237 = vunpack.c.l.b16 %v56
  %v238 = vunpack.c.h.b16 %v56
  %v239 = vunpack.c.l.b16 %v57
  %v240 = vunpack.c.h.b16 %v57
  %v241 = vunpack.c.l.b16 %v58
  %v242 = vunpack.c.h.b16 %v58
  %v243 = vunpack.c.l.b16 %v59
  %v244 = vunpack.c.h.b16 %v59
  %v245 = vunpack.c.l.b16 %v60
  %v246 = vunpack.c.h.b16 %v60
  %v247 = vunpack.c.l.b16 %v61
  %v248 = vunpack.c.h.b16 %v61
  %v249 = vunpack.c.l.b16 %v62
  %v250 = vunpack.c.h.b16 %v62
  %v251 = vunpack.c.l.b16 %v63
  %v252 = vunpack.c.h.b16 %v63
  %v253 = vunpack.c.l.b16 %v64
  %v254 = vunpack.c.h.b16 %v64
  %v255 = vunpack.c.l.b16 %v65
  %v256 = vunpack.c.h.b16 %v65
  %v257 = vunpack.c.l.b16 %v66
  %v258 = vunpack.c.h.b16 %v66
  %v259 = vunpack.c.l.b16 %v67
  %v260 = vunpack.c.h.b16 %v67
  %v261 = vunpack.c.l.b16 %v68
  %v262 = vunpack.c.h.b16 %v68
  %v263 = vunpack.c.l.b16 %v69
  %v264 = vunpack.c.h.b16 %v69
  %v265 = vunpack.c.l.b16 %v70
  %v266 = vunpack.c.h.b16 %v70
  %v267 = vunpack.c.l.b16 %v71
  %v268 = vunpack.c.h.b16 %v71
  %v269 = vunpack.c.l.b16 %v72
  %v270 = vunpack.c.h.b16 %v72
  %v271 = vunpack.c.l.b16 %v73
  %v272 = vunpack.c.h.b16 %v73
  %v273 = vunpack.c.l.b16 %v74
  %v274 = vunpack.c.h.b16 %v74
  %v275 = vunpack.c.l.b16 %v75
  %v276 = vunpack.c.h.b16 %v75
  %v277 = vunpack.c.l.b16 %v76
  %v278 = vunpack.c.h.b16 %v76
  %v279 = vunpack.c.l.b16 %v77
  %v280 = vunpack.c.h.b16 %v77
  %v281 = vunpack.c.l.b16 %v78
  %v282 = vunpack.c.h.b16 %v78
  %v283 = vunpack.c.l.b16 %v79
  %v284 = vunpack.c.h.b16 %v79
  %v285 = vunpack.c.l.b16 %v80
  %v286 = vunpack.c.h.b16 %v80
  %v287 = vunpack.c.l.b16 %v81
  %v288 = vunpack.c.h.b16 %v81
  %v289 = vunpack.c.l.b16 %v82
  %v290 = vunpack.c.h.b16 %v82
  %v291 = vunpack.c.l.b16 %v83
  %v292 = vunpack.c.h.b16 %v83
  %v293 = vunpack.c.l.b16 %v84
  %v294 = vunpack.c.h.b16 %v84
  %v295 = vunpack.c.l.b16 %v85
  %v296 = vunpack.c.h.b16 %v85
  %v297 = vunpack.c.l.b16 %v86
  %v298 = vunpack.c.h.b16 %v86
  %v299 = vunpack.c.l.b16 %v87
  %v300 = vunpack.c.h.b16 %v87
  %v301 = vunpack.c.l.b16 %v88
  %v302 = vunpack.c.h.b16 %v88
  %v303 = vunpack.c.l.b16 %v89
  %v304 = vunpack.c.h.b16 %v89
  %v305 = vunpack.c.l.b16 %v90
  %v306 = vunpack.c.h.b16 %v90
  %v307 = vunpack.c.l.b16 %v91
  %v308 = vunpack.c.h.b16 %v91
  %v309 = vunpack.c.l.b16 %v92
  %v310 = vunpack.c.h.b16 %v92
  %v311 = vpack.c.b16 %v185, %v183
  %v312 = vpack.c.b16 %v186, %v184
  %v313 = vpack.c.b16 %v189, %v187
  %v314 = vpack.c.b16 %v190, %v188
  %v315 = vpack.c.b16 %v193, %v191
  %v316 = vpack.c.b16 %v194, %v192
  %v317 = vpack.c.b16 %v197, %v195
  %v318 = vpack.c.b16 %v198, %v196
  %v319 = vpack.c.b16 %v201, %v199
  %v320 = vpack.c.b16 %v202, %v200
  %v321 = vpack.c.b16 %v205, %v203
  %v322 = vpack.c.b16 %v206, %v204
  %v323 = vpack.c.b16 %v209, %v207
  %v324 = vpack.c.b16 %v210, %v208
  %v325 = vpack.c.b16 %v213, %v211
  %v326 = vpack.c.b16 %v214, %v212
  %v327 = vpack.c.b16 %v217, %v215
  %v328 = vpack.c.b16 %v218, %v216
  %v329 = vpack.c.b16 %v221, %v219
  %v330 = vpack.c.b16 %v222, %v220
  %v331 = vpack.c.b16 %v225, %v223
  %v332 = vpack.c.b16 %v226, %v224
  %v333 = vpack.c.b16 %v229, %v227
  %v334 = vpack.c.b16 %v230, %v228
  %v335 = vpack.c.b16 %v233, %v231
  %v336 = vpack.c.b16 %v234, %v232
  %v337 = vpack.c.b16 %v237, %v235
  %v338 = vpack.c.b16 %v238, %v236
  %v339 = vpack.c.b16 %v241, %v239
  %v340 = vpack.c.b16 %v242, %v240
  %v341 = vpack.c.b16 %v245, %v243
  %v342 = vpack.c.b16 %v246, %v244
  %v343 = vpack.c.b16 %v249, %v247
  %v344 = vpack.c.b16 %v250, %v248
  %v345 = vpack.c.b16 %v253, %v251
  %v346 = vpack.c.b16 %v254, %v252
  %v347 = vpack.c.b16 %v257, %v255
  %v348 = vpack.c.b16 %v258, %v256
  %v349 = vpack.c.b16 %v261, %v259
  %v350 = vpack.c.b16 %v262, %v260
  %v351 = vpack.c.b16 %v265, %v263
  %v352 = vpack.c.b16 %v266, %v264
  %v353 = vpack.c.b16 %v269, %v267
  %v354 = vpack.c.b16 %v270, %v268
  %v355 = vpack.c.b16 %v273, %v271
  %v356 = vpack.c.b16 %v274, %v272
  %v357 = vpack.c.b16 %v277, %v275
  %v358 = vpack.c.b16 %v278, %v276
  %v359 = vpack.c.b16 %v281, %v279
  %v360 = vpack.c.b16 %v282, %v280
  %v361 = vpack.c.b16 %v285, %v283
  %v362 = vpack.c.b16 %v286, %v284
  %v363 = vpack.c.b16 %v289, %v287
  %v364 = vpack.c.b16 %v290, %v288
  %v365 = vpack.c.b16 %v293, %v291
  %v366 = vpack.c.b16 %v294, %v292
  %v367 = vpack.c.b16 %v297, %v295
  %v368 = vpack.c.b16 %v298, %v296
  %v369 = vpack.c.b16 %v301, %v299
  %v370 = vpack.c.b16 %v302, %v300
  %v371 = vpack.c.b16 %v305, %v303
  %v372 = vpack.c.b16 %v306, %v304
  %v373 = vpack.c.b16 %v309, %v307
  %v374 = vpack.c.b16 %v310, %v308
  %439 = vmatprep.subr.bf16.mxu0 %v312
  %440 = vmatpush1.bf16.msra.mxu0 %v311
  %441 = vmatprep.subr.bf16.mxu0 %v314
  %442 = vmatpush1.bf16.msra.mxu0 %v313
  %443 = vmatprep.subr.bf16.mxu0 %v316
  %444 = vmatpush1.bf16.msra.mxu0 %v315
  %445 = vmatprep.subr.bf16.mxu0 %v318
  %446 = vmatpush1.bf16.msra.mxu0 %v317
  %447 = vmatprep.subr.bf16.mxu0 %v320
  %448 = vmatpush1.bf16.msra.mxu0 %v319
  %449 = vmatprep.subr.bf16.mxu0 %v322
  %450 = vmatpush1.bf16.msra.mxu0 %v321
  %451 = vmatprep.subr.bf16.mxu0 %v324
  %452 = vmatpush1.bf16.msra.mxu0 %v323
  %453 = vmatprep.subr.bf16.mxu0 %v326
  %454 = vmatpush1.bf16.msra.mxu0 %v325
  %455 = vmatprep.subr.bf16.mxu0 %v328
  %456 = vmatpush1.bf16.msra.mxu0 %v327
  %457 = vmatprep.subr.bf16.mxu0 %v330
  %458 = vmatpush1.bf16.msra.mxu0 %v329
  %459 = vmatprep.subr.bf16.mxu0 %v332
  %460 = vmatpush1.bf16.msra.mxu0 %v331
  %461 = vmatprep.subr.bf16.mxu0 %v334
  %462 = vmatpush1.bf16.msra.mxu0 %v333
  %463 = vmatprep.subr.bf16.mxu0 %v336
  %464 = vmatpush1.bf16.msra.mxu0 %v335
  %465 = vmatprep.subr.bf16.mxu0 %v338
  %466 = vmatpush1.bf16.msra.mxu0 %v337
  %467 = vmatprep.subr.bf16.mxu0 %v340
  %468 = vmatpush1.bf16.msra.mxu0 %v339
  %469 = vmatprep.subr.bf16.mxu0 %v342
  %470 = vmatpush1.bf16.msra.mxu0 %v341
  %471 = vmatprep.mubr.bf16.mxu0 %v112
  %472 = vmatmul.mubr.bf16.gmra.mrb[0].mxu0 %v111
  %v473 = vpop.f32.mrb[0].mxu0
  %v474 = vadd.f32 %v98, %v473
  %v475 = vpop.f32.mrb[0].mxu0
  %v476 = vadd.f32 %v102, %v475
  %v477 = vpop.f32.mrb[0].mxu0
  %v478 = vpop.f32.mrb[0].mxu0
  %479 = vdwg.mxu0
  %480 = vmatprep.subr.bf16.mxu0 %v344
  %481 = vmatpush1.bf16.msra.mxu0 %v343
  %482 = vmatprep.subr.bf16.mxu0 %v346
  %483 = vmatpush1.bf16.msra.mxu0 %v345
  %484 = vmatprep.subr.bf16.mxu0 %v348
  %485 = vmatpush1.bf16.msra.mxu0 %v347
  %486 = vmatprep.subr.bf16.mxu0 %v350
  %487 = vmatpush1.bf16.msra.mxu0 %v349
  %488 = vmatprep.subr.bf16.mxu0 %v352
  %489 = vmatpush1.bf16.msra.mxu0 %v351
  %490 = vmatprep.subr.bf16.mxu0 %v354
  %491 = vmatpush1.bf16.msra.mxu0 %v353
  %492 = vmatprep.subr.bf16.mxu0 %v356
  %493 = vmatpush1.bf16.msra.mxu0 %v355
  %494 = vmatprep.subr.bf16.mxu0 %v358
  %495 = vmatpush1.bf16.msra.mxu0 %v357
  %496 = vmatprep.subr.bf16.mxu0 %v360
  %497 = vmatpush1.bf16.msra.mxu0 %v359
  %498 = vmatprep.subr.bf16.mxu0 %v362
  %499 = vmatpush1.bf16.msra.mxu0 %v361
  %500 = vmatprep.subr.bf16.mxu0 %v364
  %501 = vmatpush1.bf16.msra.mxu0 %v363
  %502 = vmatprep.subr.bf16.mxu0 %v366
  %503 = vmatpush1.bf16.msra.mxu0 %v365
  %504 = vmatprep.subr.bf16.mxu0 %v368
  %505 = vmatpush1.bf16.msra.mxu0 %v367
  %506 = vmatprep.subr.bf16.mxu0 %v370
  %507 = vmatpush1.bf16.msra.mxu0 %v369
  %508 = vmatprep.subr.bf16.mxu0 %v372
  %509 = vmatpush1.bf16.msra.mxu0 %v371
  %510 = vmatprep.subr.bf16.mxu0 %v374
  %511 = vmatpush1.bf16.msra.mxu0 %v373
  %512 = vmatprep.mubr.bf16.mxu0 %v114
  %513 = vmatmul.mubr.bf16.gmra.mrb[0].mxu0 %v113
  %v514 = vpop.f32.mrb[0].mxu0
  %v515 = vadd.f32 %v474, %v514
  %v516 = vpop.f32.mrb[0].mxu0
  %v517 = vadd.f32 %v476, %v516
  %v518 = vpop.f32.mrb[0].mxu0
  %v519 = vpop.f32.mrb[0].mxu0
  %520 = vdwg.mxu0
  %v521 = vmax.f32 %v515, 0.0
  %v522 = vmax.f32 %v517, 0.0
  %v523 = vpack.c.bf16 %v521, %v521
  %v524 = vpack.c.bf16 %v522, %v522
  %v525 = vld [vmem:[%s3] sm:$0xff]
  %v526 = vld [vmem:[%s3 + $0x8] sm:$0xff]
  %v527 = vld [vmem:[%s3 + $0x10] sm:$0xff]
  %v528 = vld [vmem:[%s3 + $0x18] sm:$0xff]
  %v529 = vld [vmem:[%s3 + $0x20] sm:$0xff]
  %v530 = vld [vmem:[%s3 + $0x28] sm:$0xff]
  %v531 = vld [vmem:[%s3 + $0x30] sm:$0xff]
  %v532 = vld [vmem:[%s3 + $0x38] sm:$0xff]
  %v533 = vld [vmem:[%s3 + $0x40] sm:$0xff]
  %v534 = vld [vmem:[%s3 + $0x48] sm:$0xff]
  %v535 = vld [vmem:[%s3 + $0x50] sm:$0xff]
  %v536 = vld [vmem:[%s3 + $0x58] sm:$0xff]
  %v537 = vld [vmem:[%s3 + $0x60] sm:$0xff]
  %v538 = vld [vmem:[%s3 + $0x68] sm:$0xff]
  %v539 = vld [vmem:[%s3 + $0x70] sm:$0xff]
  %v540 = vld [vmem:[%s3 + $0x78] sm:$0xff]
  %v541 = vld [vmem:[%s3 + $0x80] sm:$0xff]
  %v542 = vld [vmem:[%s3 + $0x88] sm:$0xff]
  %v543 = vld [vmem:[%s3 + $0x90] sm:$0xff]
  %v544 = vld [vmem:[%s3 + $0x98] sm:$0xff]
  %v545 = vld [vmem:[%s3 + $0xa0] sm:$0xff]
  %v546 = vld [vmem:[%s3 + $0xa8] sm:$0xff]
  %v547 = vld [vmem:[%s3 + $0xb0] sm:$0xff]
  %v548 = vld [vmem:[%s3 + $0xb8] sm:$0xff]
  %v549 = vld [vmem:[%s3 + $0xc0] sm:$0xff]
  %v550 = vld [vmem:[%s3 + $0xc8] sm:$0xff]
  %v551 = vld [vmem:[%s3 + $0xd0] sm:$0xff]
  %v552 = vld [vmem:[%s3 + $0xd8] sm:$0xff]
  %v553 = vld [vmem:[%s3 + $0xe0] sm:$0xff]
  %v554 = vld [vmem:[%s3 + $0xe8] sm:$0xff]
  %v555 = vld [vmem:[%s3 + $0xf0] sm:$0xff]
  %v556 = vld [vmem:[%s3 + $0xf8] sm:$0xff]
  %v557 = vld [vmem:[%s4] sm:$0x3]
  %v559 = vlaneseq
  %v560 = vshrl.u32 %v559, 7
  %v561 = vsub.s32 0, %v560
  %v562 = vrot.slane %v557, %v561
  %v563 = vlaneseq
  %v564 = vshrl.u32 %v563, 7
  %v565 = vsub.s32 1, %v564
  %v566 = vrot.slane %v557, %v565
  %v601 = vunpack.c.l.b16 %v525
  %v602 = vunpack.c.h.b16 %v525
  %v603 = vunpack.c.l.b16 %v526
  %v604 = vunpack.c.h.b16 %v526
  %v605 = vunpack.c.l.b16 %v527
  %v606 = vunpack.c.h.b16 %v527
  %v607 = vunpack.c.l.b16 %v528
  %v608 = vunpack.c.h.b16 %v528
  %v609 = vunpack.c.l.b16 %v529
  %v610 = vunpack.c.h.b16 %v529
  %v611 = vunpack.c.l.b16 %v530
  %v612 = vunpack.c.h.b16 %v530
  %v613 = vunpack.c.l.b16 %v531
  %v614 = vunpack.c.h.b16 %v531
  %v615 = vunpack.c.l.b16 %v532
  %v616 = vunpack.c.h.b16 %v532
  %v617 = vunpack.c.l.b16 %v533
  %v618 = vunpack.c.h.b16 %v533
  %v619 = vunpack.c.l.b16 %v534
  %v620 = vunpack.c.h.b16 %v534
  %v621 = vunpack.c.l.b16 %v535
  %v622 = vunpack.c.h.b16 %v535
  %v623 = vunpack.c.l.b16 %v536
  %v624 = vunpack.c.h.b16 %v536
  %v625 = vunpack.c.l.b16 %v537
  %v626 = vunpack.c.h.b16 %v537
  %v627 = vunpack.c.l.b16 %v538
  %v628 = vunpack.c.h.b16 %v538
  %v629 = vunpack.c.l.b16 %v539
  %v630 = vunpack.c.h.b16 %v539
  %v631 = vunpack.c.l.b16 %v540
  %v632 = vunpack.c.h.b16 %v540
  %v633 = vunpack.c.l.b16 %v541
  %v634 = vunpack.c.h.b16 %v541
  %v635 = vunpack.c.l.b16 %v542
  %v636 = vunpack.c.h.b16 %v542
  %v637 = vunpack.c.l.b16 %v543
  %v638 = vunpack.c.h.b16 %v543
  %v639 = vunpack.c.l.b16 %v544
  %v640 = vunpack.c.h.b16 %v544
  %v641 = vunpack.c.l.b16 %v545
  %v642 = vunpack.c.h.b16 %v545
  %v643 = vunpack.c.l.b16 %v546
  %v644 = vunpack.c.h.b16 %v546
  %v645 = vunpack.c.l.b16 %v547
  %v646 = vunpack.c.h.b16 %v547
  %v647 = vunpack.c.l.b16 %v548
  %v648 = vunpack.c.h.b16 %v548
  %v649 = vunpack.c.l.b16 %v549
  %v650 = vunpack.c.h.b16 %v549
  %v651 = vunpack.c.l.b16 %v550
  %v652 = vunpack.c.h.b16 %v550
  %v653 = vunpack.c.l.b16 %v551
  %v654 = vunpack.c.h.b16 %v551
  %v655 = vunpack.c.l.b16 %v552
  %v656 = vunpack.c.h.b16 %v552
  %v657 = vunpack.c.l.b16 %v553
  %v658 = vunpack.c.h.b16 %v553
  %v659 = vunpack.c.l.b16 %v554
  %v660 = vunpack.c.h.b16 %v554
  %v661 = vunpack.c.l.b16 %v555
  %v662 = vunpack.c.h.b16 %v555
  %v663 = vunpack.c.l.b16 %v556
  %v664 = vunpack.c.h.b16 %v556
  %v665 = vpack.c.b16 %v603, %v601
  %v666 = vpack.c.b16 %v604, %v602
  %v667 = vpack.c.b16 %v607, %v605
  %v668 = vpack.c.b16 %v608, %v606
  %v669 = vpack.c.b16 %v611, %v609
  %v670 = vpack.c.b16 %v612, %v610
  %v671 = vpack.c.b16 %v615, %v613
  %v672 = vpack.c.b16 %v616, %v614
  %v673 = vpack.c.b16 %v619, %v617
  %v674 = vpack.c.b16 %v620, %v618
  %v675 = vpack.c.b16 %v623, %v621
  %v676 = vpack.c.b16 %v624, %v622
  %v677 = vpack.c.b16 %v627, %v625
  %v678 = vpack.c.b16 %v628, %v626
  %v679 = vpack.c.b16 %v631, %v629
  %v680 = vpack.c.b16 %v632, %v630
  %v681 = vpack.c.b16 %v635, %v633
  %v682 = vpack.c.b16 %v636, %v634
  %v683 = vpack.c.b16 %v639, %v637
  %v684 = vpack.c.b16 %v640, %v638
  %v685 = vpack.c.b16 %v643, %v641
  %v686 = vpack.c.b16 %v644, %v642
  %v687 = vpack.c.b16 %v647, %v645
  %v688 = vpack.c.b16 %v648, %v646
  %v689 = vpack.c.b16 %v651, %v649
  %v690 = vpack.c.b16 %v652, %v650
  %v691 = vpack.c.b16 %v655, %v653
  %v692 = vpack.c.b16 %v656, %v654
  %v693 = vpack.c.b16 %v659, %v657
  %v694 = vpack.c.b16 %v660, %v658
  %v695 = vpack.c.b16 %v663, %v661
  %v696 = vpack.c.b16 %v664, %v662
  %729 = vmatprep.subr.bf16.mxu0 %v666
  %730 = vmatpush1.bf16.msra.mxu0 %v665
  %731 = vmatprep.subr.bf16.mxu0 %v668
  %732 = vmatpush1.bf16.msra.mxu0 %v667
  %733 = vmatprep.subr.bf16.mxu0 %v670
  %734 = vmatpush1.bf16.msra.mxu0 %v669
  %735 = vmatprep.subr.bf16.mxu0 %v672
  %736 = vmatpush1.bf16.msra.mxu0 %v671
  %737 = vmatprep.subr.bf16.mxu0 %v674
  %738 = vmatpush1.bf16.msra.mxu0 %v673
  %739 = vmatprep.subr.bf16.mxu0 %v676
  %740 = vmatpush1.bf16.msra.mxu0 %v675
  %741 = vmatprep.subr.bf16.mxu0 %v678
  %742 = vmatpush1.bf16.msra.mxu0 %v677
  %743 = vmatprep.subr.bf16.mxu0 %v680
  %744 = vmatpush1.bf16.msra.mxu0 %v679
  %745 = vmatprep.subr.bf16.mxu0 %v682
  %746 = vmatpush1.bf16.msra.mxu0 %v681
  %747 = vmatprep.subr.bf16.mxu0 %v684
  %748 = vmatpush1.bf16.msra.mxu0 %v683
  %749 = vmatprep.subr.bf16.mxu0 %v686
  %750 = vmatpush1.bf16.msra.mxu0 %v685
  %751 = vmatprep.subr.bf16.mxu0 %v688
  %752 = vmatpush1.bf16.msra.mxu0 %v687
  %753 = vmatprep.subr.bf16.mxu0 %v690
  %754 = vmatpush1.bf16.msra.mxu0 %v689
  %755 = vmatprep.subr.bf16.mxu0 %v692
  %756 = vmatpush1.bf16.msra.mxu0 %v691
  %757 = vmatprep.subr.bf16.mxu0 %v694
  %758 = vmatpush1.bf16.msra.mxu0 %v693
  %759 = vmatprep.subr.bf16.mxu0 %v696
  %760 = vmatpush1.bf16.msra.mxu0 %v695
  %761 = vmatprep.mubr.bf16.mxu0 %v524
  %762 = vmatmul.mubr.bf16.gmra.mrb[0].mxu0 %v523
  %v763 = vpop.f32.mrb[0].mxu0
  %v764 = vadd.f32 %v562, %v763
  %v765 = vpop.f32.mrb[0].mxu0
  %v766 = vadd.f32 %v566, %v765
  %v767 = vpop.f32.mrb[0].mxu0
  %v768 = vpop.f32.mrb[0].mxu0
  %769 = vdwg.mxu0
  %v770 = vmax.f32 %v764, 0.0
  %v771 = vmax.f32 %v766, 0.0
  %v772 = vpack.c.bf16 %v770, %v770
  %v773 = vpack.c.bf16 %v771, %v771
  %v774 = vld [vmem:[%s5] sm:$0xf]
  %v775 = vld [vmem:[%s5 + $0x4] sm:$0xf]
  %v776 = vld [vmem:[%s5 + $0x8] sm:$0xf]
  %v777 = vld [vmem:[%s5 + $0xc] sm:$0xf]
  %v778 = vld [vmem:[%s5 + $0x10] sm:$0xf]
  %v779 = vld [vmem:[%s5 + $0x14] sm:$0xf]
  %v780 = vld [vmem:[%s5 + $0x18] sm:$0xf]
  %v781 = vld [vmem:[%s5 + $0x1c] sm:$0xf]
  %v782 = vld [vmem:[%s5 + $0x20] sm:$0xf]
  %v783 = vld [vmem:[%s5 + $0x24] sm:$0xf]
  %v784 = vld [vmem:[%s5 + $0x28] sm:$0xf]
  %v785 = vld [vmem:[%s5 + $0x2c] sm:$0xf]
  %v786 = vld [vmem:[%s5 + $0x30] sm:$0xf]
  %v787 = vld [vmem:[%s5 + $0x34] sm:$0xf]
  %v788 = vld [vmem:[%s5 + $0x38] sm:$0xf]
  %v789 = vld [vmem:[%s5 + $0x3c] sm:$0xf]
  %v790 = vld [vmem:[%s5 + $0x40] sm:$0xf]
  %v791 = vld [vmem:[%s5 + $0x44] sm:$0xf]
  %v792 = vld [vmem:[%s5 + $0x48] sm:$0xf]
  %v793 = vld [vmem:[%s5 + $0x4c] sm:$0xf]
  %v794 = vld [vmem:[%s5 + $0x50] sm:$0xf]
  %v795 = vld [vmem:[%s5 + $0x54] sm:$0xf]
  %v796 = vld [vmem:[%s5 + $0x58] sm:$0xf]
  %v797 = vld [vmem:[%s5 + $0x5c] sm:$0xf]
  %v798 = vld [vmem:[%s5 + $0x60] sm:$0xf]
  %v799 = vld [vmem:[%s5 + $0x64] sm:$0xf]
  %v800 = vld [vmem:[%s5 + $0x68] sm:$0xf]
  %v801 = vld [vmem:[%s5 + $0x6c] sm:$0xf]
  %v802 = vld [vmem:[%s5 + $0x70] sm:$0xf]
  %v803 = vld [vmem:[%s5 + $0x74] sm:$0xf]
  %v804 = vld [vmem:[%s5 + $0x78] sm:$0xf]
  %v805 = vld [vmem:[%s5 + $0x7c] sm:$0xf]
  %v806 = vld [vmem:[%s6] sm:$0x1]
  %v808 = vlaneseq
  %v809 = vshrl.u32 %v808, 7
  %v810 = vsub.s32 0, %v809
  %v811 = vrot.slane %v806, %v810
  %v845 = vunpack.c.l.b16 %v774
  %v846 = vunpack.c.l.b16 %v775
  %v847 = vunpack.c.l.b16 %v776
  %v848 = vunpack.c.l.b16 %v777
  %v849 = vunpack.c.l.b16 %v778
  %v850 = vunpack.c.l.b16 %v779
  %v851 = vunpack.c.l.b16 %v780
  %v852 = vunpack.c.l.b16 %v781
  %v853 = vunpack.c.l.b16 %v782
  %v854 = vunpack.c.l.b16 %v783
  %v855 = vunpack.c.l.b16 %v784
  %v856 = vunpack.c.l.b16 %v785
  %v857 = vunpack.c.l.b16 %v786
  %v858 = vunpack.c.l.b16 %v787
  %v859 = vunpack.c.l.b16 %v788
  %v860 = vunpack.c.l.b16 %v789
  %v861 = vunpack.c.l.b16 %v790
  %v862 = vunpack.c.l.b16 %v791
  %v863 = vunpack.c.l.b16 %v792
  %v864 = vunpack.c.l.b16 %v793
  %v865 = vunpack.c.l.b16 %v794
  %v866 = vunpack.c.l.b16 %v795
  %v867 = vunpack.c.l.b16 %v796
  %v868 = vunpack.c.l.b16 %v797
  %v869 = vunpack.c.l.b16 %v798
  %v870 = vunpack.c.l.b16 %v799
  %v871 = vunpack.c.l.b16 %v800
  %v872 = vunpack.c.l.b16 %v801
  %v873 = vunpack.c.l.b16 %v802
  %v874 = vunpack.c.l.b16 %v803
  %v875 = vunpack.c.l.b16 %v804
  %v876 = vunpack.c.l.b16 %v805
  %v877 = vpack.c.b16 %v846, %v845
  %v878 = vpack.c.b16 %v848, %v847
  %v879 = vpack.c.b16 %v850, %v849
  %v880 = vpack.c.b16 %v852, %v851
  %v881 = vpack.c.b16 %v854, %v853
  %v882 = vpack.c.b16 %v856, %v855
  %v883 = vpack.c.b16 %v858, %v857
  %v884 = vpack.c.b16 %v860, %v859
  %v885 = vpack.c.b16 %v862, %v861
  %v886 = vpack.c.b16 %v864, %v863
  %v887 = vpack.c.b16 %v866, %v865
  %v888 = vpack.c.b16 %v868, %v867
  %v889 = vpack.c.b16 %v870, %v869
  %v890 = vpack.c.b16 %v872, %v871
  %v891 = vpack.c.b16 %v874, %v873
  %v892 = vpack.c.b16 %v876, %v875
  %909 = vmatprep.subr.bf16.mxu0 0
  %910 = vmatpush1.bf16.msra.mxu0 %v877
  %911 = vmatprep.subr.bf16.mxu0 0
  %912 = vmatpush1.bf16.msra.mxu0 %v878
  %913 = vmatprep.subr.bf16.mxu0 0
  %914 = vmatpush1.bf16.msra.mxu0 %v879
  %915 = vmatprep.subr.bf16.mxu0 0
  %916 = vmatpush1.bf16.msra.mxu0 %v880
  %917 = vmatprep.subr.bf16.mxu0 0
  %918 = vmatpush1.bf16.msra.mxu0 %v881
  %919 = vmatprep.subr.bf16.mxu0 0
  %920 = vmatpush1.bf16.msra.mxu0 %v882
  %921 = vmatprep.subr.bf16.mxu0 0
  %922 = vmatpush1.bf16.msra.mxu0 %v883
  %923 = vmatprep.subr.bf16.mxu0 0
  %924 = vmatpush1.bf16.msra.mxu0 %v884
  %925 = vmatprep.subr.bf16.mxu0 0
  %926 = vmatpush1.bf16.msra.mxu0 %v885
  %927 = vmatprep.subr.bf16.mxu0 0
  %928 = vmatpush1.bf16.msra.mxu0 %v886
  %929 = vmatprep.subr.bf16.mxu0 0
  %930 = vmatpush1.bf16.msra.mxu0 %v887
  %931 = vmatprep.subr.bf16.mxu0 0
  %932 = vmatpush1.bf16.msra.mxu0 %v888
  %933 = vmatprep.subr.bf16.mxu0 0
  %934 = vmatpush1.bf16.msra.mxu0 %v889
  %935 = vmatprep.subr.bf16.mxu0 0
  %936 = vmatpush1.bf16.msra.mxu0 %v890
  %937 = vmatprep.subr.bf16.mxu0 0
  %938 = vmatpush1.bf16.msra.mxu0 %v891
  %939 = vmatprep.subr.bf16.mxu0 0
  %940 = vmatpush1.bf16.msra.mxu0 %v892
  %941 = vmatprep.mubr.bf16.mxu0 %v773
  %942 = vmatmul.mubr.bf16.gmra.mrb[0].mxu0 %v772
  %v943 = vpop.f32.mrb[0].mxu0
  %v944 = vadd.f32 %v811, %v943
  %v945 = vpop.f32.mrb[0].mxu0
  %v946 = vpop.f32.mrb[0].mxu0
  %v947 = vpop.f32.mrb[0].mxu0
  %948 = vdwg.mxu0
  %949 = vst [vmem:[%s7] sm:$0xff] %v944
  // Predicated region
  $region30: #{simple_mlc_forward.1} parent=0 // pred_check
    _
  $region31: #{simple_mlc_forward.1} parent=0 // pred_check_branch
    %951 = sbr.rel (0) target = $region33
  $region32: #{simple_mlc_forward.1} parent=0 // pred_region
    _
  $region33: #{simple_mlc_forward.1} parent=0 // pred_fallthru
    _
  // Predicated region
  $region34: #{simple_mlc_forward.1} parent=0 // pred_check
    _
  $region35: #{simple_mlc_forward.1} parent=0 // pred_check_branch
    %953 = sbr.rel (0) target = $region37
  $region36: #{simple_mlc_forward.1} parent=0 // pred_region
    _
  $region37: #{simple_mlc_forward.1} parent=0 // pred_fallthru
    _

</llo_original>
